<compile_context>
chip_gen: v7x
topology: tpu7x:2x2x1
jax: 0.10.0
libtpu: 0.0.40
codegen_flags: <defaults>
</compile_context>

<pallas_src>
import functools

import jax
import jax.numpy as jnp
import numpy as np
from jax.experimental import pallas as pl
from jax.experimental.pallas import tpu as pltpu

PAD = 128       # lane/feature padding of hidden layers (MXU-friendly)
OUT_PAD = 8     # sublane padding of the head output (row 0 is the real logit)


def predx_kernel(x_ref, w_ref, b_ref, o_ref):
    """One batch tile of the PredX MLP, feature-major (transposed) layout.

    x_ref: (f_in_pad, b_tile) f32  -- x^T for this batch tile (zero-padded rows)
    w_ref: (L, PAD, PAD)      f32  -- w_ref[l, :out_l, :in_l] = W_l (PyTorch (out, in))
    b_ref: (L, PAD, 1)        f32  -- zero-padded biases
    o_ref: (OUT_PAD, b_tile)  f32  -- row 0 holds the logits for this tile
    """
    num_layers = w_ref.shape[0]
    out_pad = o_ref.shape[0]
    h = x_ref[...]                                   # (k, b_tile)
    k = x_ref.shape[0]
    for l in range(num_layers - 1):                  # hidden layers (static unroll)
        h = jnp.dot(w_ref[l][:, :k], h,
                    preferred_element_type=jnp.float32) + b_ref[l]
        h = jnp.where(h >= 0.0, h, 0.2 * h)          # LeakyReLU(0.2)
        k = w_ref.shape[1]
    # Head: only the first OUT_PAD rows of the last weight slab are used.
    o_ref[...] = (jnp.dot(w_ref[num_layers - 1][:out_pad, :k], h,
                          preferred_element_type=jnp.float32)
                  + b_ref[num_layers - 1][:out_pad])


def pack_params(weights, biases, pad=PAD):
    """One-time, host-side packing of all layer params into two resident slabs.

    weights[l]: (in_l, out_l), biases[l]: (out_l,).  Stored transposed (out, in).
    """
    num_layers = len(weights)
    w_pack = np.zeros((num_layers, pad, pad), np.float32)
    b_pack = np.zeros((num_layers, pad, 1), np.float32)
    for l, (w, b) in enumerate(zip(weights, biases)):
        w = np.asarray(w, np.float32)
        b = np.asarray(b, np.float32)
        f_in, f_out = w.shape
        assert f_in <= pad and f_out <= pad, (l, w.shape)
        assert b.shape == (f_out,)
        w_pack[l, :f_out, :f_in] = w.T           # (out, in) layout
        b_pack[l, :f_out, 0] = b
    assert np.asarray(weights[-1]).shape[1] <= OUT_PAD
    return jnp.asarray(w_pack), jnp.asarray(b_pack)


def _round_up(x, m):
    return -(-x // m) * m


def _default_b_tile(batch):
    """Big tiles (amortize per-step overhead) but aim for >= 2 grid steps (v7x)."""
    half = _round_up(-(-batch // 2), 128)
    return max(128, min(1024, half))


@functools.partial(jax.jit, static_argnames=("b_tile", "out_dim"))
def predx_forward(x, w_pack, b_pack, *, b_tile=None, out_dim=1):
    """Pallas forward of PredX.  x: (B, IN_DIM) f32 -> (B, out_dim) f32."""
    batch, f_in = x.shape
    num_layers, pad, _ = w_pack.shape
    assert out_dim <= OUT_PAD
    if b_tile is None:
        b_tile = _default_b_tile(batch)
    f_in_pad = _round_up(f_in, 8)
    b_pad = _round_up(batch, b_tile)

    # Transposed, lightly padded input slab (fuses under jit with callers).
    x_t = jnp.zeros((f_in_pad, b_pad), jnp.float32).at[:f_in, :batch].set(x.T)

    cost = pl.CostEstimate(
        flops=2 * num_layers * pad * pad * b_pad,
        transcendentals=0,
        bytes_accessed=4 * (f_in_pad * b_pad + w_pack.size + b_pack.size
                            + OUT_PAD * b_pad),
    )

    out_t = pl.pallas_call(
        predx_kernel,
        out_shape=jax.ShapeDtypeStruct((OUT_PAD, b_pad), jnp.float32),
        grid=(b_pad // b_tile,),
        in_specs=[
            # activations advance with the batch grid (batch = lane dimension)
            pl.BlockSpec((f_in_pad, b_tile), lambda i: (0, i)),
            # weights / biases: constant index_map -> DMA'd once, stay resident
            pl.BlockSpec((num_layers, pad, pad), lambda i: (0, 0, 0)),
            pl.BlockSpec((num_layers, pad, 1), lambda i: (0, 0, 0)),
        ],
        out_specs=pl.BlockSpec((OUT_PAD, b_tile), lambda i: (0, i)),
        compiler_params=pltpu.CompilerParams(
            dimension_semantics=("parallel",)),
        cost_estimate=cost,
    )(x_t, w_pack, b_pack)

    # Row 0 carries the real logits; padded rows/columns are sliced away here.
    return out_t[:out_dim, :batch].T


def predx_reference(x, weights, biases):
    """Exact-math (float64 numpy) reference of the PyTorch forward."""
    h = np.asarray(x, np.float64)
    for l, (w, b) in enumerate(zip(weights, biases)):
        h = h @ np.asarray(w, np.float64) + np.asarray(b, np.float64)
        if l < len(weights) - 1:
            h = np.where(h >= 0, h, 0.2 * h)
    return h


def init_params(key, in_dim, structure, out_dim=1):
    """PyTorch nn.Linear default init: U(-1/sqrt(fan_in), 1/sqrt(fan_in))."""
    dims = [in_dim] + list(structure) + [out_dim]
    weights, biases = [], []
    for i in range(len(dims) - 1):
        key, k1, k2 = jax.random.split(key, 3)
        bound = 1.0 / np.sqrt(dims[i])
        weights.append(jax.random.uniform(
            k1, (dims[i], dims[i + 1]), jnp.float32, -bound, bound))
        biases.append(jax.random.uniform(
            k2, (dims[i + 1],), jnp.float32, -bound, bound))
    return weights, biases


if __name__ == "__main__":
    key = jax.random.PRNGKey(0)
    kx, kp = jax.random.split(key)

    B, IN_DIM = 500, 23                 # batch pads to 512 -> 2 "parallel" grid steps
    STRUCTURE = [64, 32]                # cfg.STRUCTURE ; head -> 1

    x = jax.random.normal(kx, (B, IN_DIM), dtype=jnp.float32)
    weights, biases = init_params(kp, IN_DIM, STRUCTURE)

    # One-time host-side parameter packing (hoisted out of the hot path).
    w_pack, b_pack = pack_params(weights, biases)

    out = jax.block_until_ready(predx_forward(x, w_pack, b_pack))   # (B, 1)
    assert out.shape == (B, 1), out.shape

    ref = predx_reference(np.asarray(x), weights, biases)
    np.testing.assert_allclose(np.asarray(out), ref, atol=1e-4, rtol=1e-4)

    print("KERNEL_OK")
</pallas_src>

<mosaic_0001>
module attributes {stable_mosaic.version = 11 : i64} {
  func.func @predx_kernel(%arg0: i32, %arg1: memref<24x256xf32, #tpu.memory_space<vmem>>, %arg2: memref<3x128x128xf32, #tpu.memory_space<vmem>>, %arg3: memref<3x128x1xf32, #tpu.memory_space<vmem>>, %arg4: memref<8x256xf32, #tpu.memory_space<vmem>>) attributes {dimension_semantics = [#tpu.dimension_semantics<parallel>], iteration_bounds = array<i64: 2>, scalar_prefetch = 0 : i64, scratch_operands = 0 : i64, tpu.core_type = #tpu.core_type<tc>, window_params = [{transform_indices = @transform_0, window_bounds = array<i64: 24, 256>}, {pipeline_mode = #tpu.pipeline_mode<synchronous>, transform_indices = @transform_1, window_bounds = array<i64: 3, 128, 128>}, {pipeline_mode = #tpu.pipeline_mode<synchronous>, transform_indices = @transform_2, window_bounds = array<i64: 3, 128, 1>}, {transform_indices = @transform_3, window_bounds = array<i64: 8, 256>}]} {
    %c0 = arith.constant 0 : index
    %c0_0 = arith.constant 0 : index
    %0 = vector.load %arg1[%c0, %c0_0] : memref<24x256xf32, #tpu.memory_space<vmem>>, vector<24x256xf32>
    %c0_1 = arith.constant 0 : index
    %c0_2 = arith.constant 0 : index
    %c0_3 = arith.constant 0 : index
    %1 = vector.load %arg2[%c0_1, %c0_2, %c0_3] : memref<3x128x128xf32, #tpu.memory_space<vmem>>, vector<1x128x128xf32>
    %2 = vector.shape_cast %1 : vector<1x128x128xf32> to vector<128x128xf32>
    %3 = vector.extract_strided_slice %2 {offsets = [0, 0], sizes = [128, 24], strides = [1, 1]} : vector<128x128xf32> to vector<128x24xf32>
    %cst = arith.constant dense<0.000000e+00> : vector<128x256xf32>
    %4 = tpu.matmul %3, %0, %cst {dimension_numbers = #tpu.dot_dimension_numbers<[1], [0], [0], [1], [0, 0, 1, 1], [], []>} : vector<128x24xf32>, vector<24x256xf32>, vector<128x256xf32> -> vector<128x256xf32>
    %c0_4 = arith.constant 0 : index
    %c0_5 = arith.constant 0 : index
    %c0_6 = arith.constant 0 : index
    %5 = vector.load %arg3[%c0_4, %c0_5, %c0_6] : memref<3x128x1xf32, #tpu.memory_space<vmem>>, vector<1x128x1xf32>
    %6 = vector.shape_cast %5 : vector<1x128x1xf32> to vector<128x1xf32>
    %7 = vector.broadcast %6 : vector<128x1xf32> to vector<128x256xf32>
    %8 = arith.addf %4, %7 : vector<128x256xf32>
    %cst_7 = arith.constant 0.000000e+00 : f32
    %9 = vector.broadcast %cst_7 : f32 to vector<128x256xf32>
    %10 = arith.cmpf oge, %8, %9 : vector<128x256xf32>
    %cst_8 = arith.constant 2.000000e-01 : f32
    %11 = vector.broadcast %cst_8 : f32 to vector<128x256xf32>
    %12 = arith.mulf %11, %8 : vector<128x256xf32>
    %13 = arith.select %10, %8, %12 : vector<128x256xi1>, vector<128x256xf32>
    %c1 = arith.constant 1 : index
    %c0_9 = arith.constant 0 : index
    %c0_10 = arith.constant 0 : index
    %14 = vector.load %arg2[%c1, %c0_9, %c0_10] : memref<3x128x128xf32, #tpu.memory_space<vmem>>, vector<1x128x128xf32>
    %15 = vector.shape_cast %14 : vector<1x128x128xf32> to vector<128x128xf32>
    %cst_11 = arith.constant dense<0.000000e+00> : vector<128x256xf32>
    %16 = tpu.matmul %15, %13, %cst_11 {dimension_numbers = #tpu.dot_dimension_numbers<[1], [0], [0], [1], [0, 0, 1, 1], [], []>} : vector<128x128xf32>, vector<128x256xf32>, vector<128x256xf32> -> vector<128x256xf32>
    %c1_12 = arith.constant 1 : index
    %c0_13 = arith.constant 0 : index
    %c0_14 = arith.constant 0 : index
    %17 = vector.load %arg3[%c1_12, %c0_13, %c0_14] : memref<3x128x1xf32, #tpu.memory_space<vmem>>, vector<1x128x1xf32>
    %18 = vector.shape_cast %17 : vector<1x128x1xf32> to vector<128x1xf32>
    %19 = vector.broadcast %18 : vector<128x1xf32> to vector<128x256xf32>
    %20 = arith.addf %16, %19 : vector<128x256xf32>
    %cst_15 = arith.constant 0.000000e+00 : f32
    %21 = vector.broadcast %cst_15 : f32 to vector<128x256xf32>
    %22 = arith.cmpf oge, %20, %21 : vector<128x256xf32>
    %cst_16 = arith.constant 2.000000e-01 : f32
    %23 = vector.broadcast %cst_16 : f32 to vector<128x256xf32>
    %24 = arith.mulf %23, %20 : vector<128x256xf32>
    %25 = arith.select %22, %20, %24 : vector<128x256xi1>, vector<128x256xf32>
    %c2 = arith.constant 2 : index
    %c0_17 = arith.constant 0 : index
    %c0_18 = arith.constant 0 : index
    %26 = vector.load %arg2[%c2, %c0_17, %c0_18] : memref<3x128x128xf32, #tpu.memory_space<vmem>>, vector<1x128x128xf32>
    %27 = vector.shape_cast %26 : vector<1x128x128xf32> to vector<128x128xf32>
    %28 = vector.extract_strided_slice %27 {offsets = [0, 0], sizes = [8, 128], strides = [1, 1]} : vector<128x128xf32> to vector<8x128xf32>
    %cst_19 = arith.constant dense<0.000000e+00> : vector<8x256xf32>
    %29 = tpu.matmul %28, %25, %cst_19 {dimension_numbers = #tpu.dot_dimension_numbers<[1], [0], [0], [1], [0, 0, 1, 1], [], []>} : vector<8x128xf32>, vector<128x256xf32>, vector<8x256xf32> -> vector<8x256xf32>
    %c2_20 = arith.constant 2 : index
    %c0_21 = arith.constant 0 : index
    %c0_22 = arith.constant 0 : index
    %30 = vector.load %arg3[%c2_20, %c0_21, %c0_22] : memref<3x128x1xf32, #tpu.memory_space<vmem>>, vector<1x128x1xf32>
    %31 = vector.shape_cast %30 : vector<1x128x1xf32> to vector<128x1xf32>
    %32 = vector.extract_strided_slice %31 {offsets = [0, 0], sizes = [8, 1], strides = [1, 1]} : vector<128x1xf32> to vector<8x1xf32>
    %33 = vector.broadcast %32 : vector<8x1xf32> to vector<8x256xf32>
    %34 = arith.addf %29, %33 : vector<8x256xf32>
    %c0_23 = arith.constant 0 : index
    %c0_24 = arith.constant 0 : index
    %35 = vector.load %arg4[%c0_23, %c0_24] : memref<8x256xf32, #tpu.memory_space<vmem>>, vector<8x256xf32>
    tpu.vector_store %arg4[%c0_23, %c0_24], %34 {strides = array<i32>} : memref<8x256xf32, #tpu.memory_space<vmem>>, vector<8x256xf32>,
    return
  }
  func.func @transform_0(%arg0: i32) -> (i32, i32) {
    %c0_i32 = arith.constant 0 : i32
    %c0_i32_0 = arith.constant 0 : i32
    return %c0_i32, %arg0 : i32, i32
  }
  func.func @transform_1(%arg0: i32) -> (i32, i32, i32) {
    %c0_i32 = arith.constant 0 : i32
    %c0_i32_0 = arith.constant 0 : i32
    %c0_i32_1 = arith.constant 0 : i32
    %c0_i32_2 = arith.constant 0 : i32
    return %c0_i32, %c0_i32_0, %c0_i32_1 : i32, i32, i32
  }
  func.func @transform_2(%arg0: i32) -> (i32, i32, i32) {
    %c0_i32 = arith.constant 0 : i32
    %c0_i32_0 = arith.constant 0 : i32
    %c0_i32_1 = arith.constant 0 : i32
    %c0_i32_2 = arith.constant 0 : i32
    return %c0_i32, %c0_i32_0, %c0_i32_1 : i32, i32, i32
  }
  func.func @transform_3(%arg0: i32) -> (i32, i32) {
    %c0_i32 = arith.constant 0 : i32
    %c0_i32_0 = arith.constant 0 : i32
    return %c0_i32, %arg0 : i32, i32
  }
}

</mosaic_0001>

<llo_original>
// kernel: predx_forward.1
$region0: #{predx_forward.1}
  #allocation0 [shape = 'u32[]', space=smem, size = 0x4, offset = 0x4, fixed_abs, tag = 'smem constant byte address 0x4 - core index']
  #allocation1 [shape = 'u32[144,128]{1,0:T(1,128)}', space=vmem, size = 0x12000, scoped, tag = 'internal scratch']
  %s0 = inlined_call_operand.vmem [shape: f32[24,512], index: 0, kind: input, shape index: {}]
  %s1 = inlined_call_operand.vmem [shape: f32[3,128,128], index: 1, kind: input, shape index: {}]
  %s2 = inlined_call_operand.vmem [shape: f32[3,128,1], index: 2, kind: input, shape index: {}]
  %s3 = inlined_call_operand.vmem [shape: f32[8,512], index: 3, kind: output, shape index: {}]
  %s4 = sld [smem:[#allocation0]]
  $region68: #{predx_forward.1} parent=0
    _
  %s6 = ssub.s32 1, %s4
  %s7 = scalar_select 0, %s6, %s4
  $region1: #{predx_forward.1} parent=0
    #allocation2 [shape = 'u8[49152]{0}', space=vmem, size = 0xc000, scoped, tag = 'input window, operand 0']
    loop: start=0, step=1, limit=4
    $region2: #{predx_forward.1} parent=1 // loop_pre_header
      _
    $region3: #{predx_forward.1} parent=1 // loop_header
      %s9 = sphi 0, %s13
      %p10 = scmp.ge.s32.totalorder %s9, 4
      %s19 = sphi 0, %s21
      %s22 = sphi 0, %s19
      %s23 = sphi 0, %s22
      %s39 = sphi 0, %s23
      %s43 = sphi 0, %s43
      %s45 = sphi 0, %s43
      %s46 = sphi 0, %s45
      %s60 = sphi 0, %s46
      %s64 = sphi 0, %s64
      %s66 = sphi 0, %s64
      %s67 = sphi 0, %s66
      %s81 = sphi 0, %s67
      %s87 = sphi 0, %s89
      %s90 = sphi 0, %s87
      %s91 = sphi 0, %s90
      %s107 = sphi 0, %s91
    $region4: #{predx_forward.1} parent=1 // loop_header_branch
      %12 = sbr.rel (%p10) target = $region8
    $region5: #{predx_forward.1} parent=1 // loop_body
      %s14 = ssub.s32 %s9, 1
      %s15 = ssub.s32 %s9, 2
      %s16 = sadd.s32 %s9, 1
      %s17 = ssub.s32 %s9, %s16
      %p18 = scmp.eq.s32.totalorder %s17, 0
      %s20 = sadd.s32 %s19, 1
      %s21 = scalar_select %p18, %s19, %s20
      %p24 = pneg %p18
      %p25 = scmp.eq.s32.totalorder %s9, 1
      %p26 = por %p24, %p25
      %p27 = scmp.ne.s32.totalorder %s19, %s22
      %p28 = scmp.eq.s32.totalorder %s9, 0
      %p29 = por %p27, %p28
      %p30 = scmp.ne.s32.totalorder %s19, %s22
      %p31 = scmp.eq.s32.totalorder %s14, 1
      %p32 = por %p30, %p31
      %p33 = scmp.ne.s32.totalorder %s22, %s23
      %p34 = scmp.eq.s32.totalorder %s14, 0
      %p35 = por %p33, %p34
      %p36 = scmp.ne.s32.totalorder %s22, %s23
      %p37 = scmp.eq.s32.totalorder %s15, 1
      %p38 = por %p36, %p37
      %p40 = scmp.ne.s32.totalorder %s23, %s39
      %p41 = scmp.eq.s32.totalorder %s15, 0
      %p42 = por %p40, %p41
      %s44 = sadd.s32 %s43, 1
      %p47 = scmp.eq.s32.totalorder %s9, 1
      %p48 = scmp.ne.s32.totalorder %s43, %s45
      %p49 = scmp.eq.s32.totalorder %s9, 0
      %p50 = por %p48, %p49
      %p51 = scmp.ne.s32.totalorder %s43, %s45
      %p52 = scmp.eq.s32.totalorder %s14, 1
      %p53 = por %p51, %p52
      %p54 = scmp.ne.s32.totalorder %s45, %s46
      %p55 = scmp.eq.s32.totalorder %s14, 0
      %p56 = por %p54, %p55
      %p57 = scmp.ne.s32.totalorder %s45, %s46
      %p58 = scmp.eq.s32.totalorder %s15, 1
      %p59 = por %p57, %p58
      %p61 = scmp.ne.s32.totalorder %s46, %s60
      %p62 = scmp.eq.s32.totalorder %s15, 0
      %p63 = por %p61, %p62
      %s65 = sadd.s32 %s64, 1
      %p68 = scmp.eq.s32.totalorder %s9, 1
      %p69 = scmp.ne.s32.totalorder %s64, %s66
      %p70 = scmp.eq.s32.totalorder %s9, 0
      %p71 = por %p69, %p70
      %p72 = scmp.ne.s32.totalorder %s64, %s66
      %p73 = scmp.eq.s32.totalorder %s14, 1
      %p74 = por %p72, %p73
      %p75 = scmp.ne.s32.totalorder %s66, %s67
      %p76 = scmp.eq.s32.totalorder %s14, 0
      %p77 = por %p75, %p76
      %p78 = scmp.ne.s32.totalorder %s66, %s67
      %p79 = scmp.eq.s32.totalorder %s15, 1
      %p80 = por %p78, %p79
      %p82 = scmp.ne.s32.totalorder %s67, %s81
      %p83 = scmp.eq.s32.totalorder %s15, 0
      %p84 = por %p82, %p83
      %s85 = ssub.s32 %s9, %s16
      %p86 = scmp.eq.s32.totalorder %s85, 0
      %s88 = sadd.s32 %s87, 1
      %s89 = scalar_select %p86, %s87, %s88
      %p92 = pneg %p86
      %p93 = scmp.eq.s32.totalorder %s9, 1
      %p94 = por %p92, %p93
      %p95 = scmp.ne.s32.totalorder %s87, %s90
      %p96 = scmp.eq.s32.totalorder %s9, 0
      %p97 = por %p95, %p96
      %p98 = scmp.ne.s32.totalorder %s87, %s90
      %p99 = scmp.eq.s32.totalorder %s14, 1
      %p100 = por %p98, %p99
      %p101 = scmp.ne.s32.totalorder %s90, %s91
      %p102 = scmp.eq.s32.totalorder %s14, 0
      %p103 = por %p101, %p102
      %p104 = scmp.ne.s32.totalorder %s90, %s91
      %p105 = scmp.eq.s32.totalorder %s15, 1
      %p106 = por %p104, %p105
      %p108 = scmp.ne.s32.totalorder %s91, %s107
      %p109 = scmp.eq.s32.totalorder %s15, 0
      %p110 = por %p108, %p109
      %p111 = scmp.le.s32.totalorder 1, %s9
      %p112 = scmp.lt.s32.totalorder %s9, 3
      %p113 = pnand %p111, %p112
      %p114 = pneg %p113
      // Predicated region
      $region9: #{predx_forward.1} parent=5 // pred_check
        _
      $region10: #{predx_forward.1} parent=5 // pred_check_branch
        %116 = sbr.rel (%p113) target = $region12
      $region11: #{predx_forward.1} parent=5 // pred_region
        %s117 = ssub.s32 %s9, 1
        // Predicated region
        $region13: #{predx_forward.1} parent=11 // pred_check
          %p118 = pneg %p56
        $region14: #{predx_forward.1} parent=11 // pred_check_branch
          %120 = sbr.rel (%p118) target = $region16
        $region15: #{predx_forward.1} parent=11 // pred_region
          _
        $region16: #{predx_forward.1} parent=11 // pred_fallthru
          _
        // Predicated region
        $region17: #{predx_forward.1} parent=11 // pred_check
          %p121 = pneg %p77
        $region18: #{predx_forward.1} parent=11 // pred_check_branch
          %123 = sbr.rel (%p121) target = $region20
        $region19: #{predx_forward.1} parent=11 // pred_region
          _
        $region20: #{predx_forward.1} parent=11 // pred_fallthru
          _
      $region12: #{predx_forward.1} parent=5 // pred_fallthru
        _
      %p124 = scmp.lt.s32.totalorder %s9, 2
      // Predicated region
      $region21: #{predx_forward.1} parent=5 // pred_check
        %p125 = pneg %p124
      $region22: #{predx_forward.1} parent=5 // pred_check_branch
        %127 = sbr.rel (%p125) target = $region24
      $region23: #{predx_forward.1} parent=5 // pred_region
        // Predicated region
        $region25: #{predx_forward.1} parent=23 // pred_check
          %p128 = pneg %p29
        $region26: #{predx_forward.1} parent=23 // pred_check_branch
          %130 = sbr.rel (%p128) target = $region28
        $region27: #{predx_forward.1} parent=23 // pred_region
          %s131 = sand.u32 %s19, 1
          %s132 = sand.u32 %s19, 1
          %s133 = smul.addr %s132, 48
          %s134 = scalar_lea.vmem [#allocation2], %s133
          %s135 = smul.u32 2, %s9
          %s136 = smul.addr %s135, 8
          %s137 = scalar_lea.vmem %s0, %s136
          // Predicated region
          $region29: #{predx_forward.1} parent=27 // pred_check
            _
          $region30: #{predx_forward.1} parent=27 // pred_check_branch
            %139 = sbr.rel (0) target = $region32
          $region31: #{predx_forward.1} parent=27 // pred_region
            // Predicated region
            $region33: #{predx_forward.1} parent=31 // pred_check
              _
            $region34: #{predx_forward.1} parent=31 // pred_check_branch
              %141 = sbr.rel (0) target = $region36
            $region35: #{predx_forward.1} parent=31 // pred_region
              loop: start=0, step=1, limit=1
              $region37: #{predx_forward.1} parent=35 // loop_pre_header
                _
              $region38: #{predx_forward.1} parent=35 // loop_header
                %s143 = sphi 0, %s147
                %p144 = scmp.ge.s32.totalorder %s143, 1
                %s148 = sphi %s137, %s137
                %s149 = sphi %s134, %s134
              $region39: #{predx_forward.1} parent=35 // loop_header_branch
                %146 = sbr.rel (%p144) target = $region43
              $region40: #{predx_forward.1} parent=35 // loop_body
                %v150 = vld [vmem:[%s148] sm:$0xff]
                %151 = vst [vmem:[%s149] sm:$0xff] %v150
                %v152 = vld [vmem:[%s148 + $0x8] sm:$0xff]
                %153 = vst [vmem:[%s149 + $0x8] sm:$0xff] %v152
                %v154 = vld [vmem:[%s148 + $0x20] sm:$0xff]
                %155 = vst [vmem:[%s149 + $0x10] sm:$0xff] %v154
                %v156 = vld [vmem:[%s148 + $0x28] sm:$0xff]
                %157 = vst [vmem:[%s149 + $0x18] sm:$0xff] %v156
                %v158 = vld [vmem:[%s148 + $0x40] sm:$0xff]
                %159 = vst [vmem:[%s149 + $0x20] sm:$0xff] %v158
                %v160 = vld [vmem:[%s148 + $0x48] sm:$0xff]
                %161 = vst [vmem:[%s149 + $0x28] sm:$0xff] %v160
              $region41: #{predx_forward.1} parent=35 // loop_footer
                %s147 = sadd.s32 1, %s143
              $region42: #{predx_forward.1} parent=35 // loop_footer_branch
                %142 = sbr.rel target = $region38
              $region43: #{predx_forward.1} parent=35 // loop_exit
                _
            $region36: #{predx_forward.1} parent=31 // pred_fallthru
              _
            // Predicated region
            $region44: #{predx_forward.1} parent=31 // pred_check
              _
            $region45: #{predx_forward.1} parent=31 // pred_check_branch
              %163 = sbr.rel target = $region47
            $region46: #{predx_forward.1} parent=31 // pred_region
              _
            $region47: #{predx_forward.1} parent=31 // pred_fallthru
              _
          $region32: #{predx_forward.1} parent=27 // pred_fallthru
            _
          %164 = vnop
        $region28: #{predx_forward.1} parent=23 // pred_fallthru
          _
      $region24: #{predx_forward.1} parent=5 // pred_fallthru
        _
      %p165 = scmp.le.s32.totalorder 1, %s9
      %p166 = scmp.lt.s32.totalorder %s9, 3
      %p167 = pnand %p165, %p166
      %p168 = pneg %p167
      // Predicated region
      $region48: #{predx_forward.1} parent=5 // pred_check
        _
      $region49: #{predx_forward.1} parent=5 // pred_check_branch
        %170 = sbr.rel (%p167) target = $region51
      $region50: #{predx_forward.1} parent=5 // pred_region
        %s171 = ssub.s32 %s9, 1
        %s172 = sand.u32 %s22, 1
        %s173 = sand.u32 %s22, 1
        %s174 = smul.addr %s173, 48
        %s175 = scalar_lea.vmem [#allocation2], %s174
        // Predicated region
        $region52: #{predx_forward.1} parent=50 // pred_check
          %p176 = pneg %p35
        $region53: #{predx_forward.1} parent=50 // pred_check_branch
          %178 = sbr.rel (%p176) target = $region55
        $region54: #{predx_forward.1} parent=50 // pred_region
          _
        $region55: #{predx_forward.1} parent=50 // pred_fallthru
          _
        %s179 = sand.u32 %s22, 1
        %s180 = sand.u32 %s22, 1
        %s181 = smul.addr %s180, 48
        %s182 = scalar_lea.vmem [#allocation2], %s181
        %p183 = pneg %p35
        %p184 = pneg %p32
        %p185 = pneg %p56
        %p186 = pneg %p53
        %p187 = pneg %p77
        %p188 = pneg %p74
        %p189 = pneg %p103
        %p190 = pneg %p100
        %s191 = smul.u32 2, %s14
        %p192 = scmp.lt.s32.totalorder %s191, 3
        %s193 = scalar_select %p192, %s191, 3
        %s194 = smul.addr %s193, 8
        %s195 = scalar_lea.vmem %s3, %s194
        %s196 = smul.u32 2, %s14
        %s197 = smul.u32 2, %s14
        %p198 = scmp.lt.s32.totalorder %s197, 3
        %s199 = scalar_select %p198, %s197, 3
        %s200 = smul.addr %s199, 8
        %s201 = scalar_lea.vmem %s3, %s200
        %s202 = smul.u32 2, %s14
        %v203 = vld [vmem:[%s175] sm:$0xff]
        %v204 = vld [vmem:[%s175 + $0x8] sm:$0xff]
        %v205 = vld [vmem:[%s175 + $0x10] sm:$0xff]
        %v206 = vld [vmem:[%s175 + $0x18] sm:$0xff]
        %v207 = vld [vmem:[%s175 + $0x20] sm:$0xff]
        %v208 = vld [vmem:[%s175 + $0x28] sm:$0xff]
        %v209 = vld [vmem:[%s1] sm:$0xff]
        %v210 = vld [vmem:[%s1 + $0x8] sm:$0xff]
        %v211 = vld [vmem:[%s1 + $0x10] sm:$0xff]
        %v212 = vld [vmem:[%s1 + $0x18] sm:$0xff]
        %v213 = vld [vmem:[%s1 + $0x20] sm:$0xff]
        %v214 = vld [vmem:[%s1 + $0x28] sm:$0xff]
        %v215 = vld [vmem:[%s1 + $0x30] sm:$0xff]
        %v216 = vld [vmem:[%s1 + $0x38] sm:$0xff]
        %v217 = vld [vmem:[%s1 + $0x40] sm:$0xff]
        %v218 = vld [vmem:[%s1 + $0x48] sm:$0xff]
        %v219 = vld [vmem:[%s1 + $0x50] sm:$0xff]
        %v220 = vld [vmem:[%s1 + $0x58] sm:$0xff]
        %v221 = vld [vmem:[%s1 + $0x60] sm:$0xff]
        %v222 = vld [vmem:[%s1 + $0x68] sm:$0xff]
        %v223 = vld [vmem:[%s1 + $0x70] sm:$0xff]
        %v224 = vld [vmem:[%s1 + $0x78] sm:$0xff]
        %v225 = vld [vmem:[%s2] sm:$0xff]
        %v226 = vld [vmem:[%s2 + $0x8] sm:$0xff]
        %v227 = vld [vmem:[%s2 + $0x10] sm:$0xff]
        %v228 = vld [vmem:[%s2 + $0x18] sm:$0xff]
        %v229 = vld [vmem:[%s2 + $0x20] sm:$0xff]
        %v230 = vld [vmem:[%s2 + $0x28] sm:$0xff]
        %v231 = vld [vmem:[%s2 + $0x30] sm:$0xff]
        %v232 = vld [vmem:[%s2 + $0x38] sm:$0xff]
        %v233 = vld [vmem:[%s2 + $0x40] sm:$0xff]
        %v234 = vld [vmem:[%s2 + $0x48] sm:$0xff]
        %v235 = vld [vmem:[%s2 + $0x50] sm:$0xff]
        %v236 = vld [vmem:[%s2 + $0x58] sm:$0xff]
        %v237 = vld [vmem:[%s2 + $0x60] sm:$0xff]
        %v238 = vld [vmem:[%s2 + $0x68] sm:$0xff]
        %v239 = vld [vmem:[%s2 + $0x70] sm:$0xff]
        %v240 = vld [vmem:[%s2 + $0x78] sm:$0xff]
        %242 = vset.pattern.permute.xlu0 0
        %243 = vperm.xlu0 %242, %v225
        %v244 = vpop.permute.xlu0 %243
        %247 = vset.pattern.permute.xlu0 0
        %248 = vperm.xlu0 %247, %v226
        %v249 = vpop.permute.xlu0 %248
        %252 = vset.pattern.permute.xlu0 0
        %253 = vperm.xlu0 %252, %v227
        %v254 = vpop.permute.xlu0 %253
        %257 = vset.pattern.permute.xlu0 0
        %258 = vperm.xlu0 %257, %v228
        %v259 = vpop.permute.xlu0 %258
        %262 = vset.pattern.permute.xlu0 0
        %263 = vperm.xlu0 %262, %v229
        %v264 = vpop.permute.xlu0 %263
        %267 = vset.pattern.permute.xlu0 0
        %268 = vperm.xlu0 %267, %v230
        %v269 = vpop.permute.xlu0 %268
        %272 = vset.pattern.permute.xlu0 0
        %273 = vperm.xlu0 %272, %v231
        %v274 = vpop.permute.xlu0 %273
        %277 = vset.pattern.permute.xlu0 0
        %278 = vperm.xlu0 %277, %v232
        %v279 = vpop.permute.xlu0 %278
        %282 = vset.pattern.permute.xlu0 0
        %283 = vperm.xlu0 %282, %v233
        %v284 = vpop.permute.xlu0 %283
        %287 = vset.pattern.permute.xlu0 0
        %288 = vperm.xlu0 %287, %v234
        %v289 = vpop.permute.xlu0 %288
        %292 = vset.pattern.permute.xlu0 0
        %293 = vperm.xlu0 %292, %v235
        %v294 = vpop.permute.xlu0 %293
        %297 = vset.pattern.permute.xlu0 0
        %298 = vperm.xlu0 %297, %v236
        %v299 = vpop.permute.xlu0 %298
        %302 = vset.pattern.permute.xlu0 0
        %303 = vperm.xlu0 %302, %v237
        %v304 = vpop.permute.xlu0 %303
        %307 = vset.pattern.permute.xlu0 0
        %308 = vperm.xlu0 %307, %v238
        %v309 = vpop.permute.xlu0 %308
        %312 = vset.pattern.permute.xlu0 0
        %313 = vperm.xlu0 %312, %v239
        %v314 = vpop.permute.xlu0 %313
        %317 = vset.pattern.permute.xlu0 0
        %318 = vperm.xlu0 %317, %v240
        %v319 = vpop.permute.xlu0 %318
        %vm321 = vcmask 195584
        %v323 = vsel %vm321, %v209, 0
        %v326 = vsel %vm321, %v210, 0
        %v329 = vsel %vm321, %v211, 0
        %v332 = vsel %vm321, %v212, 0
        %v335 = vsel %vm321, %v213, 0
        %v338 = vsel %vm321, %v214, 0
        %v341 = vsel %vm321, %v215, 0
        %v344 = vsel %vm321, %v216, 0
        %v347 = vsel %vm321, %v217, 0
        %v350 = vsel %vm321, %v218, 0
        %v353 = vsel %vm321, %v219, 0
        %v356 = vsel %vm321, %v220, 0
        %v359 = vsel %vm321, %v221, 0
        %v362 = vsel %vm321, %v222, 0
        %v365 = vsel %vm321, %v223, 0
        %v368 = vsel %vm321, %v224, 0
        %370 = vmatprep.subr.mxu0 %v204
        %371 = vmatpush1.msra.mxu0 %v203
        %372 = vmatprep.subr.mxu0 %v206
        %373 = vmatpush1.msra.mxu0 %v205
        %374 = vmatprep.subr.mxu0 %v208
        %375 = vmatpush1.msra.mxu0 %v207
        %376 = vmatprep.subr.mxu0 0.0
        %377 = vmatpush1.msra.mxu0 0.0
        %378 = vmatprep.subr.mxu0 0.0
        %379 = vmatpush1.msra.mxu0 0.0
        %380 = vmatprep.subr.mxu0 0.0
        %381 = vmatpush1.msra.mxu0 0.0
        %382 = vmatprep.subr.mxu0 0.0
        %383 = vmatpush1.msra.mxu0 0.0
        %384 = vmatprep.subr.mxu0 0.0
        %385 = vmatpush1.msra.mxu0 0.0
        %386 = vmatprep.subr.mxu0 0.0
        %387 = vmatpush1.msra.mxu0 0.0
        %388 = vmatprep.subr.mxu0 0.0
        %389 = vmatpush1.msra.mxu0 0.0
        %390 = vmatprep.subr.mxu0 0.0
        %391 = vmatpush1.msra.mxu0 0.0
        %392 = vmatprep.subr.mxu0 0.0
        %393 = vmatpush1.msra.mxu0 0.0
        %394 = vmatprep.subr.mxu0 0.0
        %395 = vmatpush1.msra.mxu0 0.0
        %396 = vmatprep.subr.mxu0 0.0
        %397 = vmatpush1.msra.mxu0 0.0
        %398 = vmatprep.subr.mxu0 0.0
        %399 = vmatpush1.msra.mxu0 0.0
        %400 = vmatprep.subr.mxu0 0.0
        %401 = vmatpush1.msra.mxu0 0.0
        %402 = vmatprep.subr.mxu0 0.0
        %403 = vmatpush1.msra.mxu0 0.0
        %404 = vmatprep.subr.mxu0 0.0
        %405 = vmatpush1.msra.mxu0 0.0
        %406 = vmatprep.subr.mxu0 0.0
        %407 = vmatpush1.msra.mxu0 0.0
        %408 = vmatprep.subr.mxu0 0.0
        %409 = vmatpush1.msra.mxu0 0.0
        %410 = vmatprep.subr.mxu0 0.0
        %411 = vmatpush1.msra.mxu0 0.0
        %412 = vmatprep.subr.mxu0 0.0
        %413 = vmatpush1.msra.mxu0 0.0
        %414 = vmatprep.subr.mxu0 0.0
        %415 = vmatpush1.msra.mxu0 0.0
        %416 = vmatprep.subr.mxu0 0.0
        %417 = vmatpush1.msra.mxu0 0.0
        %418 = vmatprep.subr.mxu0 0.0
        %419 = vmatpush1.msra.mxu0 0.0
        %420 = vmatprep.subr.mxu0 0.0
        %421 = vmatpush1.msra.mxu0 0.0
        %422 = vmatprep.subr.mxu0 0.0
        %423 = vmatpush1.msra.mxu0 0.0
        %424 = vmatprep.subr.mxu0 0.0
        %425 = vmatpush1.msra.mxu0 0.0
        %426 = vmatprep.subr.mxu0 0.0
        %427 = vmatpush1.msra.mxu0 0.0
        %428 = vmatprep.subr.mxu0 0.0
        %429 = vmatpush1.msra.mxu0 0.0
        %430 = vmatprep.subr.mxu0 0.0
        %431 = vmatpush1.msra.mxu0 0.0
        %432 = vmatprep.subr.mxu0 0.0
        %433 = vmatpush1.msra.mxu0 0.0
        %434 = vmatprep.mubr.f32.mxu0 0.0
        %435 = vmatmul.mubr.f32.gmra.mrb[0].mxu0 %v323
        %v436 = vpop.f32.mrb[0].mxu0
        %v437 = vadd.f32 %v244, %v436
        %v438 = vpop.f32.mrb[0].mxu0
        %v439 = vadd.f32 %v244, %v438
        %440 = vmatprep.mubr.f32.mxu0 0.0
        %441 = vmatmul.mubr.f32.gmra.mrb[0].mxu0 %v326
        %v442 = vpop.f32.mrb[0].mxu0
        %v443 = vadd.f32 %v249, %v442
        %v444 = vpop.f32.mrb[0].mxu0
        %v445 = vadd.f32 %v249, %v444
        %446 = vmatprep.mubr.f32.mxu0 0.0
        %447 = vmatmul.mubr.f32.gmra.mrb[0].mxu0 %v329
        %v448 = vpop.f32.mrb[0].mxu0
        %v449 = vadd.f32 %v254, %v448
        %v450 = vpop.f32.mrb[0].mxu0
        %v451 = vadd.f32 %v254, %v450
        %452 = vmatprep.mubr.f32.mxu0 0.0
        %453 = vmatmul.mubr.f32.gmra.mrb[0].mxu0 %v332
        %v454 = vpop.f32.mrb[0].mxu0
        %v455 = vadd.f32 %v259, %v454
        %v456 = vpop.f32.mrb[0].mxu0
        %v457 = vadd.f32 %v259, %v456
        %458 = vmatprep.mubr.f32.mxu0 0.0
        %459 = vmatmul.mubr.f32.gmra.mrb[0].mxu0 %v335
        %v460 = vpop.f32.mrb[0].mxu0
        %v461 = vadd.f32 %v264, %v460
        %v462 = vpop.f32.mrb[0].mxu0
        %v463 = vadd.f32 %v264, %v462
        %464 = vmatprep.mubr.f32.mxu0 0.0
        %465 = vmatmul.mubr.f32.gmra.mrb[0].mxu0 %v338
        %v466 = vpop.f32.mrb[0].mxu0
        %v467 = vadd.f32 %v269, %v466
        %v468 = vpop.f32.mrb[0].mxu0
        %v469 = vadd.f32 %v269, %v468
        %470 = vmatprep.mubr.f32.mxu0 0.0
        %471 = vmatmul.mubr.f32.gmra.mrb[0].mxu0 %v341
        %v472 = vpop.f32.mrb[0].mxu0
        %v473 = vadd.f32 %v274, %v472
        %v474 = vpop.f32.mrb[0].mxu0
        %v475 = vadd.f32 %v274, %v474
        %476 = vmatprep.mubr.f32.mxu0 0.0
        %477 = vmatmul.mubr.f32.gmra.mrb[0].mxu0 %v344
        %v478 = vpop.f32.mrb[0].mxu0
        %v479 = vadd.f32 %v279, %v478
        %v480 = vpop.f32.mrb[0].mxu0
        %v481 = vadd.f32 %v279, %v480
        %482 = vmatprep.mubr.f32.mxu0 0.0
        %483 = vmatmul.mubr.f32.gmra.mrb[0].mxu0 %v347
        %v484 = vpop.f32.mrb[0].mxu0
        %v485 = vadd.f32 %v284, %v484
        %v486 = vpop.f32.mrb[0].mxu0
        %v487 = vadd.f32 %v284, %v486
        %488 = vmatprep.mubr.f32.mxu0 0.0
        %489 = vmatmul.mubr.f32.gmra.mrb[0].mxu0 %v350
        %v490 = vpop.f32.mrb[0].mxu0
        %v491 = vadd.f32 %v289, %v490
        %v492 = vpop.f32.mrb[0].mxu0
        %v493 = vadd.f32 %v289, %v492
        %494 = vmatprep.mubr.f32.mxu0 0.0
        %495 = vmatmul.mubr.f32.gmra.mrb[0].mxu0 %v353
        %v496 = vpop.f32.mrb[0].mxu0
        %v497 = vadd.f32 %v294, %v496
        %v498 = vpop.f32.mrb[0].mxu0
        %v499 = vadd.f32 %v294, %v498
        %500 = vmatprep.mubr.f32.mxu0 0.0
        %501 = vmatmul.mubr.f32.gmra.mrb[0].mxu0 %v356
        %v502 = vpop.f32.mrb[0].mxu0
        %v503 = vadd.f32 %v299, %v502
        %v504 = vpop.f32.mrb[0].mxu0
        %v505 = vadd.f32 %v299, %v504
        %506 = vmatprep.mubr.f32.mxu0 0.0
        %507 = vmatmul.mubr.f32.gmra.mrb[0].mxu0 %v359
        %v508 = vpop.f32.mrb[0].mxu0
        %v509 = vadd.f32 %v304, %v508
        %v510 = vpop.f32.mrb[0].mxu0
        %v511 = vadd.f32 %v304, %v510
        %512 = vmatprep.mubr.f32.mxu0 0.0
        %513 = vmatmul.mubr.f32.gmra.mrb[0].mxu0 %v362
        %v514 = vpop.f32.mrb[0].mxu0
        %v515 = vadd.f32 %v309, %v514
        %v516 = vpop.f32.mrb[0].mxu0
        %v517 = vadd.f32 %v309, %v516
        %518 = vmatprep.mubr.f32.mxu0 0.0
        %519 = vmatmul.mubr.f32.gmra.mrb[0].mxu0 %v365
        %v520 = vpop.f32.mrb[0].mxu0
        %v521 = vadd.f32 %v314, %v520
        %v522 = vpop.f32.mrb[0].mxu0
        %v523 = vadd.f32 %v314, %v522
        %524 = vmatprep.mubr.f32.mxu0 0.0
        %525 = vmatmul.mubr.f32.gmra.mrb[0].mxu0 %v368
        %v526 = vpop.f32.mrb[0].mxu0
        %v527 = vadd.f32 %v319, %v526
        %v528 = vpop.f32.mrb[0].mxu0
        %v529 = vadd.f32 %v319, %v528
        %530 = vdwg.mxu0
        %vm531 = vcmp.ge.f32.partialorder %v437, 0.0
        %vm532 = vcmp.ge.f32.partialorder %v439, 0.0
        %vm533 = vcmp.ge.f32.partialorder %v443, 0.0
        %vm534 = vcmp.ge.f32.partialorder %v445, 0.0
        %vm535 = vcmp.ge.f32.partialorder %v449, 0.0
        %vm536 = vcmp.ge.f32.partialorder %v451, 0.0
        %vm537 = vcmp.ge.f32.partialorder %v455, 0.0
        %vm538 = vcmp.ge.f32.partialorder %v457, 0.0
        %vm539 = vcmp.ge.f32.partialorder %v461, 0.0
        %vm540 = vcmp.ge.f32.partialorder %v463, 0.0
        %vm541 = vcmp.ge.f32.partialorder %v467, 0.0
        %vm542 = vcmp.ge.f32.partialorder %v469, 0.0
        %vm543 = vcmp.ge.f32.partialorder %v473, 0.0
        %vm544 = vcmp.ge.f32.partialorder %v475, 0.0
        %vm545 = vcmp.ge.f32.partialorder %v479, 0.0
        %vm546 = vcmp.ge.f32.partialorder %v481, 0.0
        %vm547 = vcmp.ge.f32.partialorder %v485, 0.0
        %vm548 = vcmp.ge.f32.partialorder %v487, 0.0
        %vm549 = vcmp.ge.f32.partialorder %v491, 0.0
        %vm550 = vcmp.ge.f32.partialorder %v493, 0.0
        %vm551 = vcmp.ge.f32.partialorder %v497, 0.0
        %vm552 = vcmp.ge.f32.partialorder %v499, 0.0
        %vm553 = vcmp.ge.f32.partialorder %v503, 0.0
        %vm554 = vcmp.ge.f32.partialorder %v505, 0.0
        %vm555 = vcmp.ge.f32.partialorder %v509, 0.0
        %vm556 = vcmp.ge.f32.partialorder %v511, 0.0
        %vm557 = vcmp.ge.f32.partialorder %v515, 0.0
        %vm558 = vcmp.ge.f32.partialorder %v517, 0.0
        %vm559 = vcmp.ge.f32.partialorder %v521, 0.0
        %vm560 = vcmp.ge.f32.partialorder %v523, 0.0
        %vm561 = vcmp.ge.f32.partialorder %v527, 0.0
        %vm562 = vcmp.ge.f32.partialorder %v529, 0.0
        %v563 = vmul.f32 %v437, 0.2
        %v564 = vmul.f32 %v439, 0.2
        %v565 = vmul.f32 %v443, 0.2
        %v566 = vmul.f32 %v445, 0.2
        %v567 = vmul.f32 %v449, 0.2
        %v568 = vmul.f32 %v451, 0.2
        %v569 = vmul.f32 %v455, 0.2
        %v570 = vmul.f32 %v457, 0.2
        %v571 = vmul.f32 %v461, 0.2
        %v572 = vmul.f32 %v463, 0.2
        %v573 = vmul.f32 %v467, 0.2
        %v574 = vmul.f32 %v469, 0.2
        %v575 = vmul.f32 %v473, 0.2
        %v576 = vmul.f32 %v475, 0.2
        %v577 = vmul.f32 %v479, 0.2
        %v578 = vmul.f32 %v481, 0.2
        %v579 = vmul.f32 %v485, 0.2
        %v580 = vmul.f32 %v487, 0.2
        %v581 = vmul.f32 %v491, 0.2
        %v582 = vmul.f32 %v493, 0.2
        %v583 = vmul.f32 %v497, 0.2
        %v584 = vmul.f32 %v499, 0.2
        %v585 = vmul.f32 %v503, 0.2
        %v586 = vmul.f32 %v505, 0.2
        %v587 = vmul.f32 %v509, 0.2
        %v588 = vmul.f32 %v511, 0.2
        %v589 = vmul.f32 %v515, 0.2
        %v590 = vmul.f32 %v517, 0.2
        %v591 = vmul.f32 %v521, 0.2
        %v592 = vmul.f32 %v523, 0.2
        %v593 = vmul.f32 %v527, 0.2
        %v594 = vmul.f32 %v529, 0.2
        %v595 = vsel %vm531, %v437, %v563
        %v596 = vsel %vm532, %v439, %v564
        %v597 = vsel %vm533, %v443, %v565
        %v598 = vsel %vm534, %v445, %v566
        %v599 = vsel %vm535, %v449, %v567
        %v600 = vsel %vm536, %v451, %v568
        %v601 = vsel %vm537, %v455, %v569
        %v602 = vsel %vm538, %v457, %v570
        %v603 = vsel %vm539, %v461, %v571
        %v604 = vsel %vm540, %v463, %v572
        %v605 = vsel %vm541, %v467, %v573
        %v606 = vsel %vm542, %v469, %v574
        %v607 = vsel %vm543, %v473, %v575
        %v608 = vsel %vm544, %v475, %v576
        %v609 = vsel %vm545, %v479, %v577
        %v610 = vsel %vm546, %v481, %v578
        %v611 = vsel %vm547, %v485, %v579
        %v612 = vsel %vm548, %v487, %v580
        %v613 = vsel %vm549, %v491, %v581
        %v614 = vsel %vm550, %v493, %v582
        %v615 = vsel %vm551, %v497, %v583
        %v616 = vsel %vm552, %v499, %v584
        %v617 = vsel %vm553, %v503, %v585
        %v618 = vsel %vm554, %v505, %v586
        %v619 = vsel %vm555, %v509, %v587
        %v620 = vsel %vm556, %v511, %v588
        %v621 = vsel %vm557, %v515, %v589
        %v622 = vsel %vm558, %v517, %v590
        %v623 = vsel %vm559, %v521, %v591
        %v624 = vsel %vm560, %v523, %v592
        %v625 = vsel %vm561, %v527, %v593
        %v626 = vsel %vm562, %v529, %v594
        %s627 = scalar_lea.vmem %s1, 128
        %v628 = vld [vmem:[%s627] sm:$0xff]
        %v629 = vld [vmem:[%s627 + $0x8] sm:$0xff]
        %v630 = vld [vmem:[%s627 + $0x10] sm:$0xff]
        %v631 = vld [vmem:[%s627 + $0x18] sm:$0xff]
        %v632 = vld [vmem:[%s627 + $0x20] sm:$0xff]
        %v633 = vld [vmem:[%s627 + $0x28] sm:$0xff]
        %v634 = vld [vmem:[%s627 + $0x30] sm:$0xff]
        %v635 = vld [vmem:[%s627 + $0x38] sm:$0xff]
        %v636 = vld [vmem:[%s627 + $0x40] sm:$0xff]
        %v637 = vld [vmem:[%s627 + $0x48] sm:$0xff]
        %v638 = vld [vmem:[%s627 + $0x50] sm:$0xff]
        %v639 = vld [vmem:[%s627 + $0x58] sm:$0xff]
        %v640 = vld [vmem:[%s627 + $0x60] sm:$0xff]
        %v641 = vld [vmem:[%s627 + $0x68] sm:$0xff]
        %v642 = vld [vmem:[%s627 + $0x70] sm:$0xff]
        %v643 = vld [vmem:[%s627 + $0x78] sm:$0xff]
        %s644 = scalar_lea.vmem %s2, 128
        %v645 = vld [vmem:[%s644] sm:$0xff]
        %v646 = vld [vmem:[%s644 + $0x8] sm:$0xff]
        %v647 = vld [vmem:[%s644 + $0x10] sm:$0xff]
        %v648 = vld [vmem:[%s644 + $0x18] sm:$0xff]
        %v649 = vld [vmem:[%s644 + $0x20] sm:$0xff]
        %v650 = vld [vmem:[%s644 + $0x28] sm:$0xff]
        %v651 = vld [vmem:[%s644 + $0x30] sm:$0xff]
        %v652 = vld [vmem:[%s644 + $0x38] sm:$0xff]
        %v653 = vld [vmem:[%s644 + $0x40] sm:$0xff]
        %v654 = vld [vmem:[%s644 + $0x48] sm:$0xff]
        %v655 = vld [vmem:[%s644 + $0x50] sm:$0xff]
        %v656 = vld [vmem:[%s644 + $0x58] sm:$0xff]
        %v657 = vld [vmem:[%s644 + $0x60] sm:$0xff]
        %v658 = vld [vmem:[%s644 + $0x68] sm:$0xff]
        %v659 = vld [vmem:[%s644 + $0x70] sm:$0xff]
        %v660 = vld [vmem:[%s644 + $0x78] sm:$0xff]
        %662 = vset.pattern.permute.xlu0 0
        %663 = vperm.xlu0 %662, %v645
        %v664 = vpop.permute.xlu0 %663
        %667 = vset.pattern.permute.xlu0 0
        %668 = vperm.xlu0 %667, %v646
        %v669 = vpop.permute.xlu0 %668
        %672 = vset.pattern.permute.xlu0 0
        %673 = vperm.xlu0 %672, %v647
        %v674 = vpop.permute.xlu0 %673
        %677 = vset.pattern.permute.xlu0 0
        %678 = vperm.xlu0 %677, %v648
        %v679 = vpop.permute.xlu0 %678
        %682 = vset.pattern.permute.xlu0 0
        %683 = vperm.xlu0 %682, %v649
        %v684 = vpop.permute.xlu0 %683
        %687 = vset.pattern.permute.xlu0 0
        %688 = vperm.xlu0 %687, %v650
        %v689 = vpop.permute.xlu0 %688
        %692 = vset.pattern.permute.xlu0 0
        %693 = vperm.xlu0 %692, %v651
        %v694 = vpop.permute.xlu0 %693
        %697 = vset.pattern.permute.xlu0 0
        %698 = vperm.xlu0 %697, %v652
        %v699 = vpop.permute.xlu0 %698
        %702 = vset.pattern.permute.xlu0 0
        %703 = vperm.xlu0 %702, %v653
        %v704 = vpop.permute.xlu0 %703
        %707 = vset.pattern.permute.xlu0 0
        %708 = vperm.xlu0 %707, %v654
        %v709 = vpop.permute.xlu0 %708
        %712 = vset.pattern.permute.xlu0 0
        %713 = vperm.xlu0 %712, %v655
        %v714 = vpop.permute.xlu0 %713
        %717 = vset.pattern.permute.xlu0 0
        %718 = vperm.xlu0 %717, %v656
        %v719 = vpop.permute.xlu0 %718
        %722 = vset.pattern.permute.xlu0 0
        %723 = vperm.xlu0 %722, %v657
        %v724 = vpop.permute.xlu0 %723
        %727 = vset.pattern.permute.xlu0 0
        %728 = vperm.xlu0 %727, %v658
        %v729 = vpop.permute.xlu0 %728
        %732 = vset.pattern.permute.xlu0 0
        %733 = vperm.xlu0 %732, %v659
        %v734 = vpop.permute.xlu0 %733
        %737 = vset.pattern.permute.xlu0 0
        %738 = vperm.xlu0 %737, %v660
        %v739 = vpop.permute.xlu0 %738
        %741 = vmatprep.subr.mxu0 %v596
        %742 = vmatpush1.msra.mxu0 %v595
        %743 = vmatprep.subr.mxu0 %v598
        %744 = vmatpush1.msra.mxu0 %v597
        %745 = vmatprep.subr.mxu0 %v600
        %746 = vmatpush1.msra.mxu0 %v599
        %747 = vmatprep.subr.mxu0 %v602
        %748 = vmatpush1.msra.mxu0 %v601
        %749 = vmatprep.subr.mxu0 %v604
        %750 = vmatpush1.msra.mxu0 %v603
        %751 = vmatprep.subr.mxu0 %v606
        %752 = vmatpush1.msra.mxu0 %v605
        %753 = vmatprep.subr.mxu0 %v608
        %754 = vmatpush1.msra.mxu0 %v607
        %755 = vmatprep.subr.mxu0 %v610
        %756 = vmatpush1.msra.mxu0 %v609
        %757 = vmatprep.subr.mxu0 %v612
        %758 = vmatpush1.msra.mxu0 %v611
        %759 = vmatprep.subr.mxu0 %v614
        %760 = vmatpush1.msra.mxu0 %v613
        %761 = vmatprep.subr.mxu0 %v616
        %762 = vmatpush1.msra.mxu0 %v615
        %763 = vmatprep.subr.mxu0 %v618
        %764 = vmatpush1.msra.mxu0 %v617
        %765 = vmatprep.subr.mxu0 %v620
        %766 = vmatpush1.msra.mxu0 %v619
        %767 = vmatprep.subr.mxu0 %v622
        %768 = vmatpush1.msra.mxu0 %v621
        %769 = vmatprep.subr.mxu0 %v624
        %770 = vmatpush1.msra.mxu0 %v623
        %771 = vmatprep.subr.mxu0 %v626
        %772 = vmatpush1.msra.mxu0 %v625
        %773 = vmatprep.subr.mxu0 0.0
        %774 = vmatpush1.msra.mxu0 0.0
        %775 = vmatprep.subr.mxu0 0.0
        %776 = vmatpush1.msra.mxu0 0.0
        %777 = vmatprep.subr.mxu0 0.0
        %778 = vmatpush1.msra.mxu0 0.0
        %779 = vmatprep.subr.mxu0 0.0
        %780 = vmatpush1.msra.mxu0 0.0
        %781 = vmatprep.subr.mxu0 0.0
        %782 = vmatpush1.msra.mxu0 0.0
        %783 = vmatprep.subr.mxu0 0.0
        %784 = vmatpush1.msra.mxu0 0.0
        %785 = vmatprep.subr.mxu0 0.0
        %786 = vmatpush1.msra.mxu0 0.0
        %787 = vmatprep.subr.mxu0 0.0
        %788 = vmatpush1.msra.mxu0 0.0
        %789 = vmatprep.subr.mxu0 0.0
        %790 = vmatpush1.msra.mxu0 0.0
        %791 = vmatprep.subr.mxu0 0.0
        %792 = vmatpush1.msra.mxu0 0.0
        %793 = vmatprep.subr.mxu0 0.0
        %794 = vmatpush1.msra.mxu0 0.0
        %795 = vmatprep.subr.mxu0 0.0
        %796 = vmatpush1.msra.mxu0 0.0
        %797 = vmatprep.subr.mxu0 0.0
        %798 = vmatpush1.msra.mxu0 0.0
        %799 = vmatprep.subr.mxu0 0.0
        %800 = vmatpush1.msra.mxu0 0.0
        %801 = vmatprep.subr.mxu0 0.0
        %802 = vmatpush1.msra.mxu0 0.0
        %803 = vmatprep.subr.mxu0 0.0
        %804 = vmatpush1.msra.mxu0 0.0
        %805 = vmatprep.mubr.f32.mxu0 0.0
        %806 = vmatmul.mubr.f32.gmra.mrb[0].mxu0 %v628
        %v807 = vpop.f32.mrb[0].mxu0
        %v808 = vadd.f32 %v664, %v807
        %v809 = vpop.f32.mrb[0].mxu0
        %v810 = vadd.f32 %v664, %v809
        %811 = vmatprep.mubr.f32.mxu0 0.0
        %812 = vmatmul.mubr.f32.gmra.mrb[0].mxu0 %v629
        %v813 = vpop.f32.mrb[0].mxu0
        %v814 = vadd.f32 %v669, %v813
        %v815 = vpop.f32.mrb[0].mxu0
        %v816 = vadd.f32 %v669, %v815
        %817 = vmatprep.mubr.f32.mxu0 0.0
        %818 = vmatmul.mubr.f32.gmra.mrb[0].mxu0 %v630
        %v819 = vpop.f32.mrb[0].mxu0
        %v820 = vadd.f32 %v674, %v819
        %v821 = vpop.f32.mrb[0].mxu0
        %v822 = vadd.f32 %v674, %v821
        %823 = vmatprep.mubr.f32.mxu0 0.0
        %824 = vmatmul.mubr.f32.gmra.mrb[0].mxu0 %v631
        %v825 = vpop.f32.mrb[0].mxu0
        %v826 = vadd.f32 %v679, %v825
        %v827 = vpop.f32.mrb[0].mxu0
        %v828 = vadd.f32 %v679, %v827
        %829 = vmatprep.mubr.f32.mxu0 0.0
        %830 = vmatmul.mubr.f32.gmra.mrb[0].mxu0 %v632
        %v831 = vpop.f32.mrb[0].mxu0
        %v832 = vadd.f32 %v684, %v831
        %v833 = vpop.f32.mrb[0].mxu0
        %v834 = vadd.f32 %v684, %v833
        %835 = vmatprep.mubr.f32.mxu0 0.0
        %836 = vmatmul.mubr.f32.gmra.mrb[0].mxu0 %v633
        %v837 = vpop.f32.mrb[0].mxu0
        %v838 = vadd.f32 %v689, %v837
        %v839 = vpop.f32.mrb[0].mxu0
        %v840 = vadd.f32 %v689, %v839
        %841 = vmatprep.mubr.f32.mxu0 0.0
        %842 = vmatmul.mubr.f32.gmra.mrb[0].mxu0 %v634
        %v843 = vpop.f32.mrb[0].mxu0
        %v844 = vadd.f32 %v694, %v843
        %v845 = vpop.f32.mrb[0].mxu0
        %v846 = vadd.f32 %v694, %v845
        %847 = vmatprep.mubr.f32.mxu0 0.0
        %848 = vmatmul.mubr.f32.gmra.mrb[0].mxu0 %v635
        %v849 = vpop.f32.mrb[0].mxu0
        %v850 = vadd.f32 %v699, %v849
        %v851 = vpop.f32.mrb[0].mxu0
        %v852 = vadd.f32 %v699, %v851
        %853 = vmatprep.mubr.f32.mxu0 0.0
        %854 = vmatmul.mubr.f32.gmra.mrb[0].mxu0 %v636
        %v855 = vpop.f32.mrb[0].mxu0
        %v856 = vadd.f32 %v704, %v855
        %v857 = vpop.f32.mrb[0].mxu0
        %v858 = vadd.f32 %v704, %v857
        %859 = vmatprep.mubr.f32.mxu0 0.0
        %860 = vmatmul.mubr.f32.gmra.mrb[0].mxu0 %v637
        %v861 = vpop.f32.mrb[0].mxu0
        %v862 = vadd.f32 %v709, %v861
        %v863 = vpop.f32.mrb[0].mxu0
        %v864 = vadd.f32 %v709, %v863
        %865 = vmatprep.mubr.f32.mxu0 0.0
        %866 = vmatmul.mubr.f32.gmra.mrb[0].mxu0 %v638
        %v867 = vpop.f32.mrb[0].mxu0
        %v868 = vadd.f32 %v714, %v867
        %v869 = vpop.f32.mrb[0].mxu0
        %v870 = vadd.f32 %v714, %v869
        %871 = vmatprep.mubr.f32.mxu0 0.0
        %872 = vmatmul.mubr.f32.gmra.mrb[0].mxu0 %v639
        %v873 = vpop.f32.mrb[0].mxu0
        %v874 = vadd.f32 %v719, %v873
        %v875 = vpop.f32.mrb[0].mxu0
        %v876 = vadd.f32 %v719, %v875
        %877 = vmatprep.mubr.f32.mxu0 0.0
        %878 = vmatmul.mubr.f32.gmra.mrb[0].mxu0 %v640
        %v879 = vpop.f32.mrb[0].mxu0
        %v880 = vadd.f32 %v724, %v879
        %v881 = vpop.f32.mrb[0].mxu0
        %v882 = vadd.f32 %v724, %v881
        %883 = vmatprep.mubr.f32.mxu0 0.0
        %884 = vmatmul.mubr.f32.gmra.mrb[0].mxu0 %v641
        %v885 = vpop.f32.mrb[0].mxu0
        %v886 = vadd.f32 %v729, %v885
        %v887 = vpop.f32.mrb[0].mxu0
        %v888 = vadd.f32 %v729, %v887
        %889 = vmatprep.mubr.f32.mxu0 0.0
        %890 = vmatmul.mubr.f32.gmra.mrb[0].mxu0 %v642
        %v891 = vpop.f32.mrb[0].mxu0
        %v892 = vadd.f32 %v734, %v891
        %v893 = vpop.f32.mrb[0].mxu0
        %v894 = vadd.f32 %v734, %v893
        %895 = vmatprep.mubr.f32.mxu0 0.0
        %896 = vmatmul.mubr.f32.gmra.mrb[0].mxu0 %v643
        %v897 = vpop.f32.mrb[0].mxu0
        %v898 = vadd.f32 %v739, %v897
        %v899 = vpop.f32.mrb[0].mxu0
        %v900 = vadd.f32 %v739, %v899
        %901 = vdwg.mxu0
        %vm902 = vcmp.ge.f32.partialorder %v808, 0.0
        %vm903 = vcmp.ge.f32.partialorder %v810, 0.0
        %vm904 = vcmp.ge.f32.partialorder %v814, 0.0
        %vm905 = vcmp.ge.f32.partialorder %v816, 0.0
        %vm906 = vcmp.ge.f32.partialorder %v820, 0.0
        %vm907 = vcmp.ge.f32.partialorder %v822, 0.0
        %vm908 = vcmp.ge.f32.partialorder %v826, 0.0
        %vm909 = vcmp.ge.f32.partialorder %v828, 0.0
        %vm910 = vcmp.ge.f32.partialorder %v832, 0.0
        %vm911 = vcmp.ge.f32.partialorder %v834, 0.0
        %vm912 = vcmp.ge.f32.partialorder %v838, 0.0
        %vm913 = vcmp.ge.f32.partialorder %v840, 0.0
        %vm914 = vcmp.ge.f32.partialorder %v844, 0.0
        %vm915 = vcmp.ge.f32.partialorder %v846, 0.0
        %vm916 = vcmp.ge.f32.partialorder %v850, 0.0
        %vm917 = vcmp.ge.f32.partialorder %v852, 0.0
        %vm918 = vcmp.ge.f32.partialorder %v856, 0.0
        %vm919 = vcmp.ge.f32.partialorder %v858, 0.0
        %vm920 = vcmp.ge.f32.partialorder %v862, 0.0
        %vm921 = vcmp.ge.f32.partialorder %v864, 0.0
        %vm922 = vcmp.ge.f32.partialorder %v868, 0.0
        %vm923 = vcmp.ge.f32.partialorder %v870, 0.0
        %vm924 = vcmp.ge.f32.partialorder %v874, 0.0
        %vm925 = vcmp.ge.f32.partialorder %v876, 0.0
        %vm926 = vcmp.ge.f32.partialorder %v880, 0.0
        %vm927 = vcmp.ge.f32.partialorder %v882, 0.0
        %vm928 = vcmp.ge.f32.partialorder %v886, 0.0
        %vm929 = vcmp.ge.f32.partialorder %v888, 0.0
        %vm930 = vcmp.ge.f32.partialorder %v892, 0.0
        %vm931 = vcmp.ge.f32.partialorder %v894, 0.0
        %vm932 = vcmp.ge.f32.partialorder %v898, 0.0
        %vm933 = vcmp.ge.f32.partialorder %v900, 0.0
        %v934 = vmul.f32 %v808, 0.2
        %v935 = vmul.f32 %v810, 0.2
        %v936 = vmul.f32 %v814, 0.2
        %v937 = vmul.f32 %v816, 0.2
        %v938 = vmul.f32 %v820, 0.2
        %v939 = vmul.f32 %v822, 0.2
        %v940 = vmul.f32 %v826, 0.2
        %v941 = vmul.f32 %v828, 0.2
        %v942 = vmul.f32 %v832, 0.2
        %v943 = vmul.f32 %v834, 0.2
        %v944 = vmul.f32 %v838, 0.2
        %v945 = vmul.f32 %v840, 0.2
        %v946 = vmul.f32 %v844, 0.2
        %v947 = vmul.f32 %v846, 0.2
        %v948 = vmul.f32 %v850, 0.2
        %v949 = vmul.f32 %v852, 0.2
        %v950 = vmul.f32 %v856, 0.2
        %v951 = vmul.f32 %v858, 0.2
        %v952 = vmul.f32 %v862, 0.2
        %v953 = vmul.f32 %v864, 0.2
        %v954 = vmul.f32 %v868, 0.2
        %v955 = vmul.f32 %v870, 0.2
        %v956 = vmul.f32 %v874, 0.2
        %v957 = vmul.f32 %v876, 0.2
        %v958 = vmul.f32 %v880, 0.2
        %v959 = vmul.f32 %v882, 0.2
        %v960 = vmul.f32 %v886, 0.2
        %v961 = vmul.f32 %v888, 0.2
        %v962 = vmul.f32 %v892, 0.2
        %v963 = vmul.f32 %v894, 0.2
        %v964 = vmul.f32 %v898, 0.2
        %v965 = vmul.f32 %v900, 0.2
        %v966 = vsel %vm902, %v808, %v934
        %v967 = vsel %vm903, %v810, %v935
        %v968 = vsel %vm904, %v814, %v936
        %v969 = vsel %vm905, %v816, %v937
        %v970 = vsel %vm906, %v820, %v938
        %v971 = vsel %vm907, %v822, %v939
        %v972 = vsel %vm908, %v826, %v940
        %v973 = vsel %vm909, %v828, %v941
        %v974 = vsel %vm910, %v832, %v942
        %v975 = vsel %vm911, %v834, %v943
        %v976 = vsel %vm912, %v838, %v944
        %v977 = vsel %vm913, %v840, %v945
        %v978 = vsel %vm914, %v844, %v946
        %v979 = vsel %vm915, %v846, %v947
        %v980 = vsel %vm916, %v850, %v948
        %v981 = vsel %vm917, %v852, %v949
        %v982 = vsel %vm918, %v856, %v950
        %v983 = vsel %vm919, %v858, %v951
        %v984 = vsel %vm920, %v862, %v952
        %v985 = vsel %vm921, %v864, %v953
        %v986 = vsel %vm922, %v868, %v954
        %v987 = vsel %vm923, %v870, %v955
        %v988 = vsel %vm924, %v874, %v956
        %v989 = vsel %vm925, %v876, %v957
        %v990 = vsel %vm926, %v880, %v958
        %v991 = vsel %vm927, %v882, %v959
        %v992 = vsel %vm928, %v886, %v960
        %v993 = vsel %vm929, %v888, %v961
        %v994 = vsel %vm930, %v892, %v962
        %v995 = vsel %vm931, %v894, %v963
        %v996 = vsel %vm932, %v898, %v964
        %v997 = vsel %vm933, %v900, %v965
        %s998 = scalar_lea.vmem %s1, 256
        %v999 = vld [vmem:[%s998] sm:$0xff]
        %s1000 = scalar_lea.vmem %s2, 256
        %v1001 = vld [vmem:[%s1000] sm:$0xff]
        %1003 = vset.pattern.permute.xlu0 0
        %1004 = vperm.xlu0 %1003, %v1001
        %v1005 = vpop.permute.xlu0 %1004
        %1007 = vmatprep.subr.mxu0 %v967
        %1008 = vmatpush1.msra.mxu0 %v966
        %1009 = vmatprep.subr.mxu0 %v969
        %1010 = vmatpush1.msra.mxu0 %v968
        %1011 = vmatprep.subr.mxu0 %v971
        %1012 = vmatpush1.msra.mxu0 %v970
        %1013 = vmatprep.subr.mxu0 %v973
        %1014 = vmatpush1.msra.mxu0 %v972
        %1015 = vmatprep.subr.mxu0 %v975
        %1016 = vmatpush1.msra.mxu0 %v974
        %1017 = vmatprep.subr.mxu0 %v977
        %1018 = vmatpush1.msra.mxu0 %v976
        %1019 = vmatprep.subr.mxu0 %v979
        %1020 = vmatpush1.msra.mxu0 %v978
        %1021 = vmatprep.subr.mxu0 %v981
        %1022 = vmatpush1.msra.mxu0 %v980
        %1023 = vmatprep.subr.mxu0 %v983
        %1024 = vmatpush1.msra.mxu0 %v982
        %1025 = vmatprep.subr.mxu0 %v985
        %1026 = vmatpush1.msra.mxu0 %v984
        %1027 = vmatprep.subr.mxu0 %v987
        %1028 = vmatpush1.msra.mxu0 %v986
        %1029 = vmatprep.subr.mxu0 %v989
        %1030 = vmatpush1.msra.mxu0 %v988
        %1031 = vmatprep.subr.mxu0 %v991
        %1032 = vmatpush1.msra.mxu0 %v990
        %1033 = vmatprep.subr.mxu0 %v993
        %1034 = vmatpush1.msra.mxu0 %v992
        %1035 = vmatprep.subr.mxu0 %v995
        %1036 = vmatpush1.msra.mxu0 %v994
        %1037 = vmatprep.subr.mxu0 %v997
        %1038 = vmatpush1.msra.mxu0 %v996
        %1039 = vmatprep.subr.mxu0 0.0
        %1040 = vmatpush1.msra.mxu0 0.0
        %1041 = vmatprep.subr.mxu0 0.0
        %1042 = vmatpush1.msra.mxu0 0.0
        %1043 = vmatprep.subr.mxu0 0.0
        %1044 = vmatpush1.msra.mxu0 0.0
        %1045 = vmatprep.subr.mxu0 0.0
        %1046 = vmatpush1.msra.mxu0 0.0
        %1047 = vmatprep.subr.mxu0 0.0
        %1048 = vmatpush1.msra.mxu0 0.0
        %1049 = vmatprep.subr.mxu0 0.0
        %1050 = vmatpush1.msra.mxu0 0.0
        %1051 = vmatprep.subr.mxu0 0.0
        %1052 = vmatpush1.msra.mxu0 0.0
        %1053 = vmatprep.subr.mxu0 0.0
        %1054 = vmatpush1.msra.mxu0 0.0
        %1055 = vmatprep.subr.mxu0 0.0
        %1056 = vmatpush1.msra.mxu0 0.0
        %1057 = vmatprep.subr.mxu0 0.0
        %1058 = vmatpush1.msra.mxu0 0.0
        %1059 = vmatprep.subr.mxu0 0.0
        %1060 = vmatpush1.msra.mxu0 0.0
        %1061 = vmatprep.subr.mxu0 0.0
        %1062 = vmatpush1.msra.mxu0 0.0
        %1063 = vmatprep.subr.mxu0 0.0
        %1064 = vmatpush1.msra.mxu0 0.0
        %1065 = vmatprep.subr.mxu0 0.0
        %1066 = vmatpush1.msra.mxu0 0.0
        %1067 = vmatprep.subr.mxu0 0.0
        %1068 = vmatpush1.msra.mxu0 0.0
        %1069 = vmatprep.subr.mxu0 0.0
        %1070 = vmatpush1.msra.mxu0 0.0
        %1071 = vmatprep.mubr.f32.mxu0 0.0
        %1072 = vmatmul.mubr.f32.gmra.mrb[0].mxu0 %v999
        %v1073 = vpop.f32.mrb[0].mxu0
        %v1074 = vadd.f32 %v1005, %v1073
        %v1075 = vpop.f32.mrb[0].mxu0
        %v1076 = vadd.f32 %v1005, %v1075
        %1077 = vdwg.mxu0
        %1078 = vst [vmem:[%s201] sm:$0xff] %v1074
        %1079 = vst [vmem:[%s201 + $0x8] sm:$0xff] %v1076
        %s1080 = smul.u32 2, %s14
        %p1081 = scmp.lt.s32.totalorder %s1080, 3
        %s1082 = scalar_select %p1081, %s1080, 3
        %s1083 = smul.addr %s1082, 8
        %s1084 = scalar_lea.vmem %s3, %s1083
        // Predicated region
        $region56: #{predx_forward.1} parent=50 // pred_check
          %p1085 = pneg %p100
        $region57: #{predx_forward.1} parent=50 // pred_check_branch
          %1087 = sbr.rel (%p1085) target = $region59
        $region58: #{predx_forward.1} parent=50 // pred_region
          %s1088 = smul.u32 2, %s14
        $region59: #{predx_forward.1} parent=50 // pred_fallthru
          _
      $region51: #{predx_forward.1} parent=5 // pred_fallthru
        _
      %p1089 = scmp.le.s32.totalorder 2, %s9
      // Predicated region
      $region60: #{predx_forward.1} parent=5 // pred_check
        %p1090 = pneg %p1089
      $region61: #{predx_forward.1} parent=5 // pred_check_branch
        %1092 = sbr.rel (%p1090) target = $region63
      $region62: #{predx_forward.1} parent=5 // pred_region
        %s1093 = ssub.s32 %s9, 2
        // Predicated region
        $region64: #{predx_forward.1} parent=62 // pred_check
          %p1094 = pneg %p106
        $region65: #{predx_forward.1} parent=62 // pred_check_branch
          %1096 = sbr.rel (%p1094) target = $region67
        $region66: #{predx_forward.1} parent=62 // pred_region
          %s1097 = smul.u32 2, %s15
          %p1098 = scmp.lt.s32.totalorder %s1097, 3
          %s1099 = scalar_select %p1098, %s1097, 3
          %s1100 = smul.addr %s1099, 8
          %s1101 = scalar_lea.vmem %s3, %s1100
        $region67: #{predx_forward.1} parent=62 // pred_fallthru
          _
      $region63: #{predx_forward.1} parent=5 // pred_fallthru
        _
    $region6: #{predx_forward.1} parent=1 // loop_footer
      %s13 = sadd.s32 1, %s9
    $region7: #{predx_forward.1} parent=1 // loop_footer_branch
      %8 = sbr.rel target = $region3
    $region8: #{predx_forward.1} parent=1 // loop_exit
      _

</llo_original>
